<compile_context>
chip_gen: v7x
topology: tpu7x:2x2x1
jax: 0.10.0
libtpu: 0.0.40
codegen_flags: <defaults>
</compile_context>

<pallas_src>
import jax
import jax.numpy as jnp
from jax.experimental import pallas as pl
from jax.experimental.pallas import tpu as pltpu

EPS = 1e-5
C1, C2, C3 = 64, 128, 1024


# ---------------------------------------------------------------------------------
# Shared in-kernel helpers
# ---------------------------------------------------------------------------------
def _conv1(x, w1):
    """Per-point 3 -> 64 linear as three VPU broadcast FMAs (an MXU matmul with K=3
    would be ~97% zero padding)."""
    return (x[:, 0:1] * w1[0:1, :]
            + x[:, 1:2] * w1[1:2, :]
            + x[:, 2:3] * w1[2:3, :])


def _bn_scale_shift(s_ref, ss_ref, g_ref, be_ref, inv_count):
    """Fold training-mode BatchNorm (batch stats, biased var) into per-channel
    scale/shift.  s_ref/ss_ref hold per-core partial sums of shape (P, 1, C)."""
    s = jnp.sum(s_ref[...], axis=0)                      # (1, C)  reduce core partials
    ss = jnp.sum(ss_ref[...], axis=0)
    mean = s * inv_count
    var = jnp.maximum(ss * inv_count - mean * mean, 0.0)
    scale = g_ref[...] * jax.lax.rsqrt(var + EPS)
    shift = be_ref[...] - mean * scale
    return scale, shift


def _bn_relu_matmul(h, s_ref, ss_ref, g_ref, be_ref, w_ref, inv_count):
    scale, shift = _bn_scale_shift(s_ref, ss_ref, g_ref, be_ref, inv_count)
    a = jnp.maximum(h * scale + shift, 0.0)
    return jnp.dot(a.astype(jnp.bfloat16), w_ref[...],
                   preferred_element_type=jnp.float32)


def _accumulate_stats(i, h, s_ref, ss_ref):
    """Per-channel sum / sum-of-squares, accumulated across row tiles.  The row sums run
    on the MXU (ones @ h, ones @ h*h); the VPU only pays one pass for h*h."""
    @pl.when(i == 0)
    def _():
        s_ref[...] = jnp.zeros(s_ref.shape, s_ref.dtype)
        ss_ref[...] = jnp.zeros(ss_ref.shape, ss_ref.dtype)

    ones = jnp.ones((8, h.shape[0]), jnp.float32)        # M=8 pass; result rows identical
    s_ref[...] += jnp.dot(ones, h, preferred_element_type=jnp.float32)[0:1][None]
    ss_ref[...] += jnp.dot(ones, h * h, preferred_element_type=jnp.float32)[0:1][None]


# ---------------------------------------------------------------------------------
# Stages 1-3: "compute the conv stack up to layer `depth` (pre-BN) and emit its stats".
# Stage 3 additionally emits per-batch max/min of the pre-BN conv3 activation.
# ---------------------------------------------------------------------------------
def _make_stage_kernel(depth, inv_count, k_batch, n_point):
    assert depth in (1, 2, 3)

    if depth == 1:
        def kernel(x_ref, w1_ref, s_ref, ss_ref):
            i = pl.program_id(1)
            h = _conv1(x_ref[...], w1_ref[...])
            _accumulate_stats(i, h, s_ref, ss_ref)
        return kernel

    if depth == 2:
        def kernel(x_ref, w1_ref, s1_ref, ss1_ref, g1_ref, be1_ref, w2_ref,
                   s_ref, ss_ref):
            i = pl.program_id(1)
            h = _conv1(x_ref[...], w1_ref[...])
            h = _bn_relu_matmul(h, s1_ref, ss1_ref, g1_ref, be1_ref, w2_ref, inv_count)
            _accumulate_stats(i, h, s_ref, ss_ref)
        return kernel

    def kernel(x_ref, w1_ref, s1_ref, ss1_ref, g1_ref, be1_ref, w2_ref,
               s2_ref, ss2_ref, g2_ref, be2_ref, w3_ref,
               s_ref, ss_ref, hmax_ref, hmin_ref):
        i = pl.program_id(1)
        h = _conv1(x_ref[...], w1_ref[...])
        h = _bn_relu_matmul(h, s1_ref, ss1_ref, g1_ref, be1_ref, w2_ref, inv_count)
        h = _bn_relu_matmul(h, s2_ref, ss2_ref, g2_ref, be2_ref, w3_ref, inv_count)
        _accumulate_stats(i, h, s_ref, ss_ref)
        # The tile spans k_batch whole batch elements -> per-batch max/min directly
        # (no cross-tile accumulation / re-init needed).
        hr = h.reshape(k_batch, n_point, h.shape[-1])
        hmax_ref[...] = jnp.max(hr, axis=1)[None]
        hmin_ref[...] = jnp.min(hr, axis=1)[None]
    return kernel


# ---------------------------------------------------------------------------------
# Stage 4: finish bn3 + relu + global max pool (exact max/min trick), then the fc head.
# ---------------------------------------------------------------------------------
def _make_fc_kernel(inv_count):
    def kernel(hmax_ref, hmin_ref, s3_ref, ss3_ref, g3_ref, be3_ref,
               wf1_ref, gf1_ref, bef1_ref,
               wf2_ref, gf2_ref, bef2_ref,
               wf_ref, bf_ref, out_ref):
        scale, shift = _bn_scale_shift(s3_ref, ss3_ref, g3_ref, be3_ref, inv_count)
        # max over points of relu(scale*h + shift)
        #   == relu(max(scale*max_h + shift, scale*min_h + shift))   (exact)
        pooled = jnp.maximum(
            jnp.maximum(hmax_ref[...] * scale + shift,
                        hmin_ref[...] * scale + shift), 0.0)         # (B, 1024)

        def bn_relu(h, g, be):
            m = jnp.mean(h, axis=0, keepdims=True)
            v = jnp.maximum(jnp.mean(h * h, axis=0, keepdims=True) - m * m, 0.0)
            sc = g * jax.lax.rsqrt(v + EPS)
            return jnp.maximum(h * sc + (be - m * sc), 0.0)

        f = jnp.dot(pooled.astype(jnp.bfloat16), wf1_ref[...],
                    preferred_element_type=jnp.float32)              # (B, 512)
        f = bn_relu(f, gf1_ref[...], bef1_ref[...])
        f = jnp.dot(f.astype(jnp.bfloat16), wf2_ref[...],
                    preferred_element_type=jnp.float32)              # (B, 256)
        f = bn_relu(f, gf2_ref[...], bef2_ref[...])
        out_ref[...] = jnp.dot(f.astype(jnp.bfloat16), wf_ref[...],
                               preferred_element_type=jnp.float32) + bf_ref[...]
    return kernel


# ---------------------------------------------------------------------------------
# Wrapper
# ---------------------------------------------------------------------------------
def _rows_per_tile(B, N, target):
    """Rows per grid step = k*N (k whole batch elements): k divides B, k*N % 16 == 0
    (bf16 sublane packing), k*N <= target when possible."""
    best = None
    for k in range(1, B + 1):
        if B % k or (k * N) % 16:
            continue
        if k * N <= target:
            best = k
        else:
            if best is None:
                best = k
            break
    return best


def tnet_forward(x, params, num_point, *, row_target=1024):
    B, N, C = x.shape
    assert C == 3
    # TODO(synk): only the num_point == N case of max_pool2d((num_point,1),(2,2)) is
    # implemented (the intended PointNet usage -> global max over points).
    assert N == num_point
    assert N % 8 == 0, "tnet_forward requires N % 8 == 0 (sublane-aligned point blocks)"

    (w1, g1, be1, w2, g2, be2, w3, g3, be3,
     wf1, gf1, bef1, wf2, gf2, bef2, wf, bf) = params

    k = _rows_per_tile(B, N, row_target)
    # TODO(synk): tiles always span whole batch elements; a very large N (k == 1 with
    # N >> row_target) would need per-batch max/min accumulation and a larger VMEM limit.
    assert k is not None, "need a divisor k of B with (k * N) % 16 == 0"
    tm = k * N                       # rows per grid step
    nt = (B * N) // tm               # total row tiles
    P = 2 if nt % 2 == 0 else 1      # 2-way core-parallel row split (v7x); harmless on 1-TC
    npc = nt // P                    # row tiles per parallel slice
    inv_bn = 1.0 / float(B * N)
    f32 = jnp.float32

    cp = pltpu.CompilerParams(dimension_semantics=("parallel", "arbitrary"),
                              vmem_limit_bytes=32 << 20)

    xf = x.reshape(B * N, 3).astype(f32)

    def row_spec():
        return pl.BlockSpec((tm, 3), lambda p, i: (p * npc + i, 0))

    def rep2(shape):
        return pl.BlockSpec(shape, lambda p, i: (0, 0))

    def rep3(shape):
        return pl.BlockSpec(shape, lambda p, i: (0, 0, 0))

    def stat_out(c):                 # per-core partial stats: block (1,1,C) of (P,1,C)
        return pl.BlockSpec((1, 1, c), lambda p, i: (p, 0, 0))

    def stat_shape(c):
        return jax.ShapeDtypeStruct((P, 1, c), f32)

    def pool_spec():                 # per-tile (k whole batch elems) max/min rows
        return pl.BlockSpec((1, k, C3), lambda p, i: (p * npc + i, 0, 0))

    # --- stage 1: conv1 -> bn1 stats (x is the only HBM read) ----------------------
    s1, ss1 = pl.pallas_call(
        _make_stage_kernel(1, inv_bn, k, N),
        grid=(P, npc),
        in_specs=[row_spec(), rep2((3, C1))],
        out_specs=(stat_out(C1), stat_out(C1)),
        out_shape=(stat_shape(C1), stat_shape(C1)),
        compiler_params=cp,
    )(xf, w1)

    # --- stage 2: recompute conv1, bn1 + relu + conv2 -> bn2 stats ------------------
    s2, ss2 = pl.pallas_call(
        _make_stage_kernel(2, inv_bn, k, N),
        grid=(P, npc),
        in_specs=[row_spec(), rep2((3, C1)),
                  rep3((P, 1, C1)), rep3((P, 1, C1)), rep2((1, C1)), rep2((1, C1)),
                  rep2((C1, C2))],
        out_specs=(stat_out(C2), stat_out(C2)),
        out_shape=(stat_shape(C2), stat_shape(C2)),
        compiler_params=cp,
    )(xf, w1, s1, ss1, g1, be1, w2)

    # --- stage 3: recompute conv1/conv2 path, conv3 -> bn3 stats + per-batch max/min --
    s3, ss3, hmax, hmin = pl.pallas_call(
        _make_stage_kernel(3, inv_bn, k, N),
        grid=(P, npc),
        in_specs=[row_spec(), rep2((3, C1)),
                  rep3((P, 1, C1)), rep3((P, 1, C1)), rep2((1, C1)), rep2((1, C1)),
                  rep2((C1, C2)),
                  rep3((P, 1, C2)), rep3((P, 1, C2)), rep2((1, C2)), rep2((1, C2)),
                  rep2((C2, C3))],
        out_specs=(stat_out(C3), stat_out(C3), pool_spec(), pool_spec()),
        out_shape=(stat_shape(C3), stat_shape(C3),
                   jax.ShapeDtypeStruct((nt, k, C3), f32),
                   jax.ShapeDtypeStruct((nt, k, C3), f32)),
        compiler_params=cp,
    )(xf, w1, s1, ss1, g1, be1, w2, s2, ss2, g2, be2, w3)

    # --- stage 4: bn3 + relu + global max pool + fc head (tiny, un-gridded) ---------
    bf_iden = bf + jnp.eye(3, dtype=f32).reshape(1, 9)   # fold identity into fc bias
    vmem = pl.BlockSpec(memory_space=pltpu.MemorySpace.VMEM)
    out = pl.pallas_call(
        _make_fc_kernel(inv_bn),
        out_shape=jax.ShapeDtypeStruct((B, 9), f32),
        in_specs=[vmem] * 14,
        out_specs=vmem,
        compiler_params=pltpu.CompilerParams(vmem_limit_bytes=32 << 20),
    )(hmax.reshape(B, C3), hmin.reshape(B, C3), s3, ss3, g3, be3,
      wf1, gf1, bef1, wf2, gf2, bef2, wf, bf_iden)

    return out.reshape(B, 3, 3)


# ---------------------------------------------------------------------------------
# Parameters / pure-JAX reference (mirrors the kernel's precision choices exactly:
# bf16 matmul operands with f32 accumulation, f32 everywhere else).
# ---------------------------------------------------------------------------------
def init_params(key):
    """Conv/fc biases that feed straight into training-mode BN are omitted: they cancel
    exactly in (h - mean).  Matmul weights are stored bf16 (MXU operands)."""
    keys = iter(jax.random.split(key, 24))

    def dense(cin, cout, dtype=jnp.bfloat16):
        w = jax.random.normal(next(keys), (cin, cout), jnp.float32) / jnp.sqrt(float(cin))
        return w.astype(dtype)

    def gamma(c):
        return 1.0 + 0.1 * jax.random.normal(next(keys), (1, c), jnp.float32)

    def beta(c):
        return 0.1 * jax.random.normal(next(keys), (1, c), jnp.float32)

    return [
        dense(3, C1, jnp.float32), gamma(C1), beta(C1),    # conv1 + bn1
        dense(C1, C2), gamma(C2), beta(C2),                # conv2 + bn2
        dense(C2, C3), gamma(C3), beta(C3),                # conv3 + bn3
        dense(C3, 512), gamma(512), beta(512),             # fc1 + fcbn1
        dense(512, 256), gamma(256), beta(256),            # fc2 + fcbn2
        dense(256, 9),                                     # fc weight (bf16 MXU operand)
        0.01 * jax.random.normal(next(keys), (1, 9), jnp.float32),  # fc bias
    ]


def tnet_reference(x, params):
    (w1, g1, be1, w2, g2, be2, w3, g3, be3,
     wf1, gf1, bef1, wf2, gf2, bef2, wf, bf) = params
    B, N, _ = x.shape
    f32, bf16 = jnp.float32, jnp.bfloat16

    def scale_shift(h, g, be):
        m = jnp.mean(h, axis=0, keepdims=True)
        v = jnp.maximum(jnp.mean(h * h, axis=0, keepdims=True) - m * m, 0.0)
        sc = g * jax.lax.rsqrt(v + EPS)
        return sc, be - m * sc

    xf = x.reshape(B * N, 3).astype(f32)
    h1 = _conv1(xf, w1)
    sc1, sh1 = scale_shift(h1, g1, be1)
    a1 = jnp.maximum(h1 * sc1 + sh1, 0.0)

    h2 = jnp.dot(a1.astype(bf16), w2, preferred_element_type=f32)
    sc2, sh2 = scale_shift(h2, g2, be2)
    a2 = jnp.maximum(h2 * sc2 + sh2, 0.0)

    h3 = jnp.dot(a2.astype(bf16), w3, preferred_element_type=f32)
    sc3, sh3 = scale_shift(h3, g3, be3)
    a3 = jnp.maximum(h3 * sc3 + sh3, 0.0)
    p = jnp.max(a3.reshape(B, N, -1), axis=1)                        # global max pool

    f = jnp.dot(p.astype(bf16), wf1, preferred_element_type=f32)
    scf1, shf1 = scale_shift(f, gf1, bef1)
    f = jnp.maximum(f * scf1 + shf1, 0.0)
    f = jnp.dot(f.astype(bf16), wf2, preferred_element_type=f32)
    scf2, shf2 = scale_shift(f, gf2, bef2)
    f = jnp.maximum(f * scf2 + shf2, 0.0)
    o = jnp.dot(f.astype(bf16), wf, preferred_element_type=f32) + bf
    o = o + jnp.eye(3, dtype=f32).reshape(1, 9)
    return o.reshape(B, 3, 3)


if __name__ == "__main__":
    def check(B, N, row_target, key):
        kx, kp = jax.random.split(key)
        x = jax.random.normal(kx, (B, N, 3), jnp.float32)
        params = init_params(kp)
        out = jax.block_until_ready(
            tnet_forward(x, params, num_point=N, row_target=row_target))
        assert out.shape == (B, 3, 3)
        assert bool(jnp.all(jnp.isfinite(out)))
        ref = tnet_reference(x, params)
        err = float(jnp.max(jnp.abs(out - ref)))
        # Both paths use bf16 matmul operands with f32 accumulation; residual diff is
        # reduction-order / ulp level.
        assert err < 2e-2, f"max abs diff {err}"

    key = jax.random.PRNGKey(0)
    k1, k2 = jax.random.split(key)
    check(2, 16, 1024, k1)   # batch=2, num_point=16: single tile, P=1
    check(4, 16, 32, k2)     # multi-tile grid, exercises the 2-way parallel row split
    print("KERNEL_OK")
</pallas_src>

<mosaic_0001>
module attributes {stable_mosaic.version = 11 : i64} {
  func.func @kernel(%arg0: i32, %arg1: i32, %arg2: memref<32x3xf32, #tpu.memory_space<vmem>>, %arg3: memref<3x64xf32, #tpu.memory_space<vmem>>, %arg4: memref<1x1x64xf32, #tpu.memory_space<vmem>>, %arg5: memref<1x1x64xf32, #tpu.memory_space<vmem>>) attributes {dimension_semantics = [#tpu.dimension_semantics<parallel>, #tpu.dimension_semantics<arbitrary>], iteration_bounds = array<i64: 1, 1>, scalar_prefetch = 0 : i64, scratch_operands = 0 : i64, tpu.core_type = #tpu.core_type<tc>, window_params = [{transform_indices = @transform_0, window_bounds = array<i64: 32, 3>}, {pipeline_mode = #tpu.pipeline_mode<synchronous>, transform_indices = @transform_1, window_bounds = array<i64: 3, 64>}, {transform_indices = @transform_2, window_bounds = array<i64: 1, 1, 64>}, {transform_indices = @transform_3, window_bounds = array<i64: 1, 1, 64>}]} {
    %c0 = arith.constant 0 : index
    %c0_0 = arith.constant 0 : index
    %0 = vector.load %arg2[%c0, %c0_0] : memref<32x3xf32, #tpu.memory_space<vmem>>, vector<32x3xf32>
    %c0_1 = arith.constant 0 : index
    %c0_2 = arith.constant 0 : index
    %1 = vector.load %arg3[%c0_1, %c0_2] : memref<3x64xf32, #tpu.memory_space<vmem>>, vector<3x64xf32>
    %2 = vector.extract_strided_slice %0 {offsets = [0, 0], sizes = [32, 1], strides = [1, 1]} : vector<32x3xf32> to vector<32x1xf32>
    %3 = vector.extract_strided_slice %1 {offsets = [0, 0], sizes = [1, 64], strides = [1, 1]} : vector<3x64xf32> to vector<1x64xf32>
    %4 = vector.broadcast %2 : vector<32x1xf32> to vector<32x64xf32>
    %5 = vector.broadcast %3 : vector<1x64xf32> to vector<32x64xf32>
    %6 = arith.mulf %4, %5 : vector<32x64xf32>
    %7 = vector.extract_strided_slice %0 {offsets = [0, 1], sizes = [32, 1], strides = [1, 1]} : vector<32x3xf32> to vector<32x1xf32>
    %8 = vector.extract_strided_slice %1 {offsets = [1, 0], sizes = [1, 64], strides = [1, 1]} : vector<3x64xf32> to vector<1x64xf32>
    %9 = vector.broadcast %7 : vector<32x1xf32> to vector<32x64xf32>
    %10 = vector.broadcast %8 : vector<1x64xf32> to vector<32x64xf32>
    %11 = arith.mulf %9, %10 : vector<32x64xf32>
    %12 = arith.addf %6, %11 : vector<32x64xf32>
    %13 = vector.extract_strided_slice %0 {offsets = [0, 2], sizes = [32, 1], strides = [1, 1]} : vector<32x3xf32> to vector<32x1xf32>
    %14 = vector.extract_strided_slice %1 {offsets = [2, 0], sizes = [1, 64], strides = [1, 1]} : vector<3x64xf32> to vector<1x64xf32>
    %15 = vector.broadcast %13 : vector<32x1xf32> to vector<32x64xf32>
    %16 = vector.broadcast %14 : vector<1x64xf32> to vector<32x64xf32>
    %17 = arith.mulf %15, %16 : vector<32x64xf32>
    %18 = arith.addf %12, %17 : vector<32x64xf32>
    %c0_i32 = arith.constant 0 : i32
    %19 = arith.cmpi eq, %arg1, %c0_i32 : i32
    %20 = arith.extui %19 : i1 to i32
    %c0_i32_3 = arith.constant 0 : i32
    %21 = arith.cmpi ne, %20, %c0_i32_3 : i32
    scf.if %21 {
      %cst_18 = arith.constant 0.000000e+00 : f32
      %36 = vector.broadcast %cst_18 : f32 to vector<1x1x64xf32>
      %c0_19 = arith.constant 0 : index
      %c0_20 = arith.constant 0 : index
      %c0_21 = arith.constant 0 : index
      %37 = vector.load %arg4[%c0_19, %c0_20, %c0_21] : memref<1x1x64xf32, #tpu.memory_space<vmem>>, vector<1x1x64xf32>
      tpu.vector_store %arg4[%c0_19, %c0_20, %c0_21], %36 {strides = array<i32>} : memref<1x1x64xf32, #tpu.memory_space<vmem>>, vector<1x1x64xf32>,
      %cst_22 = arith.constant 0.000000e+00 : f32
      %38 = vector.broadcast %cst_22 : f32 to vector<1x1x64xf32>
      %c0_23 = arith.constant 0 : index
      %c0_24 = arith.constant 0 : index
      %c0_25 = arith.constant 0 : index
      %39 = vector.load %arg5[%c0_23, %c0_24, %c0_25] : memref<1x1x64xf32, #tpu.memory_space<vmem>>, vector<1x1x64xf32>
      tpu.vector_store %arg5[%c0_23, %c0_24, %c0_25], %38 {strides = array<i32>} : memref<1x1x64xf32, #tpu.memory_space<vmem>>, vector<1x1x64xf32>,
    } else {
    }
    %cst = arith.constant 1.000000e+00 : f32
    %22 = vector.broadcast %cst : f32 to vector<8x32xf32>
    %c0_4 = arith.constant 0 : index
    %c0_5 = arith.constant 0 : index
    %c0_6 = arith.constant 0 : index
    %23 = vector.load %arg4[%c0_4, %c0_5, %c0_6] : memref<1x1x64xf32, #tpu.memory_space<vmem>>, vector<1x1x64xf32>
    %cst_7 = arith.constant dense<0.000000e+00> : vector<8x64xf32>
    %24 = tpu.matmul %22, %18, %cst_7 {dimension_numbers = #tpu.dot_dimension_numbers<[1], [0], [0], [1], [0, 0, 1, 1], [], []>} : vector<8x32xf32>, vector<32x64xf32>, vector<8x64xf32> -> vector<8x64xf32>
    %25 = vector.extract_strided_slice %24 {offsets = [0, 0], sizes = [1, 64], strides = [1, 1]} : vector<8x64xf32> to vector<1x64xf32>
    %26 = vector.shape_cast %25 : vector<1x64xf32> to vector<1x1x64xf32>
    %27 = arith.addf %23, %26 : vector<1x1x64xf32>
    %c0_8 = arith.constant 0 : index
    %c0_9 = arith.constant 0 : index
    %c0_10 = arith.constant 0 : index
    %28 = vector.load %arg4[%c0_8, %c0_9, %c0_10] : memref<1x1x64xf32, #tpu.memory_space<vmem>>, vector<1x1x64xf32>
    tpu.vector_store %arg4[%c0_8, %c0_9, %c0_10], %27 {strides = array<i32>} : memref<1x1x64xf32, #tpu.memory_space<vmem>>, vector<1x1x64xf32>,
    %c0_11 = arith.constant 0 : index
    %c0_12 = arith.constant 0 : index
    %c0_13 = arith.constant 0 : index
    %29 = vector.load %arg5[%c0_11, %c0_12, %c0_13] : memref<1x1x64xf32, #tpu.memory_space<vmem>>, vector<1x1x64xf32>
    %30 = arith.mulf %18, %18 : vector<32x64xf32>
    %cst_14 = arith.constant dense<0.000000e+00> : vector<8x64xf32>
    %31 = tpu.matmul %22, %30, %cst_14 {dimension_numbers = #tpu.dot_dimension_numbers<[1], [0], [0], [1], [0, 0, 1, 1], [], []>} : vector<8x32xf32>, vector<32x64xf32>, vector<8x64xf32> -> vector<8x64xf32>
    %32 = vector.extract_strided_slice %31 {offsets = [0, 0], sizes = [1, 64], strides = [1, 1]} : vector<8x64xf32> to vector<1x64xf32>
    %33 = vector.shape_cast %32 : vector<1x64xf32> to vector<1x1x64xf32>
    %34 = arith.addf %29, %33 : vector<1x1x64xf32>
    %c0_15 = arith.constant 0 : index
    %c0_16 = arith.constant 0 : index
    %c0_17 = arith.constant 0 : index
    %35 = vector.load %arg5[%c0_15, %c0_16, %c0_17] : memref<1x1x64xf32, #tpu.memory_space<vmem>>, vector<1x1x64xf32>
    tpu.vector_store %arg5[%c0_15, %c0_16, %c0_17], %34 {strides = array<i32>} : memref<1x1x64xf32, #tpu.memory_space<vmem>>, vector<1x1x64xf32>,
    return
  }
  func.func @transform_0(%arg0: i32, %arg1: i32) -> (i32, i32) {
    %c1_i32 = arith.constant 1 : i32
    %0 = arith.muli %arg0, %c1_i32 : i32
    %1 = arith.addi %0, %arg1 : i32
    %c0_i32 = arith.constant 0 : i32
    %c0_i32_0 = arith.constant 0 : i32
    return %1, %c0_i32 : i32, i32
  }
  func.func @transform_1(%arg0: i32, %arg1: i32) -> (i32, i32) {
    %c0_i32 = arith.constant 0 : i32
    %c0_i32_0 = arith.constant 0 : i32
    %c0_i32_1 = arith.constant 0 : i32
    return %c0_i32, %c0_i32_0 : i32, i32
  }
  func.func @transform_2(%arg0: i32, %arg1: i32) -> (i32, i32, i32) {
    %c0_i32 = arith.constant 0 : i32
    %c0_i32_0 = arith.constant 0 : i32
    %c0_i32_1 = arith.constant 0 : i32
    return %arg0, %c0_i32, %c0_i32_0 : i32, i32, i32
  }
  func.func @transform_3(%arg0: i32, %arg1: i32) -> (i32, i32, i32) {
    %c0_i32 = arith.constant 0 : i32
    %c0_i32_0 = arith.constant 0 : i32
    %c0_i32_1 = arith.constant 0 : i32
    return %arg0, %c0_i32, %c0_i32_0 : i32, i32, i32
  }
}

</mosaic_0001>

<llo_original>
// kernel: tpu_custom_call.1
$region0: #{tpu_custom_call.1}
  #allocation0 [shape = 'u32[]', space=smem, size = 0x4, offset = 0x4, fixed_abs, tag = 'smem constant byte address 0x4 - core index']
  #allocation1 [shape = 'u32[144,128]{1,0:T(1,128)}', space=vmem, size = 0x12000, scoped, tag = 'internal scratch']
  %s0 = inlined_call_operand.vmem [shape: f32[32,3], index: 0, kind: input, shape index: {}]
  %s1 = inlined_call_operand.vmem [shape: f32[3,64], index: 1, kind: input, shape index: {}]
  %s2 = inlined_call_operand.hbm [shape: f32[1,1,64], index: 2, kind: output, shape index: {0}]
  %s3 = inlined_call_operand.hbm [shape: f32[1,1,64], index: 3, kind: output, shape index: {1}]
  %4 = xla_tuple %s2, %s3
  %s5 = sld [smem:[#allocation0]]
  $region30: #{tpu_custom_call.1} parent=0
    _
  %s7 = ssub.s32 1, %s5
  %s8 = scalar_select 0, %s7, %s5
  $region1: #{tpu_custom_call.1} parent=0
    #allocation2 [shape = 'u8[512]{0}', space=vmem, size = 0x400, scoped, tag = 'output window, operand 0, single buffered']
    #allocation3 [shape = 's32[1]{0}', space=sflag, size = 0x4, scoped, tag = 'scoped memory for tpu_custom_call.1']
    #allocation4 [shape = 'u8[512]{0}', space=vmem, size = 0x400, scoped, tag = 'output window, operand 1, single buffered']
    #allocation5 [shape = 's32[1]{0}', space=sflag, size = 0x4, scoped, tag = 'scoped memory for tpu_custom_call.1']
    %9 = vsyncpa [#allocation3], 0
    %10 = vsyncpa [#allocation5], 0
    // Predicated region
    $region2: #{tpu_custom_call.1} parent=1 // pred_check
      _
    $region3: #{tpu_custom_call.1} parent=1 // pred_check_branch
      %12 = sbr.rel (0) target = $region5
    $region4: #{tpu_custom_call.1} parent=1 // pred_region
      %s13 = sadd.s32 0, 0
      %s14 = smul.u32 4, %s13
      %p15 = scmp.lt.s32.totalorder %s14, 3
      %s16 = scalar_select %p15, %s14, 3
      %s17 = smul.addr %s16, 8
      %s18 = scalar_lea.vmem %s0, %s17
      %s19 = sadd.s32 0, 0
      %s20 = smul.u32 4, %s19
    $region5: #{tpu_custom_call.1} parent=1 // pred_fallthru
      _
    // Predicated region
    $region6: #{tpu_custom_call.1} parent=1 // pred_check
      _
    $region7: #{tpu_custom_call.1} parent=1 // pred_check_branch
      %22 = sbr.rel (0) target = $region9
    $region8: #{tpu_custom_call.1} parent=1 // pred_region
      _
    $region9: #{tpu_custom_call.1} parent=1 // pred_fallthru
      _
    %s23 = sadd.s32 0, 0
    %s24 = smul.u32 4, %s23
    %p25 = scmp.lt.s32.totalorder %s24, 3
    %s26 = scalar_select %p25, %s24, 3
    %s27 = smul.addr %s26, 8
    %s28 = scalar_lea.vmem %s0, %s27
    %s29 = sadd.s32 0, 0
    %s30 = smul.u32 4, %s29
    %p31 = scmp.lt.s32.totalorder %s30, 3
    %s32 = scalar_select %p31, %s30, 3
    %s33 = smul.addr %s32, 8
    %s34 = scalar_lea.vmem %s0, %s33
    %s35 = sadd.s32 0, 0
    %s36 = smul.u32 4, %s35
    %v37 = vld [vmem:[%s34] sm:$0xff]
    %v38 = vld [vmem:[%s34 + $0x8] sm:$0xff]
    %v39 = vld [vmem:[%s34 + $0x10] sm:$0xff]
    %v40 = vld [vmem:[%s34 + $0x18] sm:$0xff]
    %v41 = vld [vmem:[%s1] sm:$0x7]
    %43 = vset.pattern.permute.xlu0 0
    %44 = vperm.xlu0 %43, %v37
    %v45 = vpop.permute.xlu0 %44
    %48 = vset.pattern.permute.xlu0 0
    %49 = vperm.xlu0 %48, %v38
    %v50 = vpop.permute.xlu0 %49
    %53 = vset.pattern.permute.xlu0 0
    %54 = vperm.xlu0 %53, %v39
    %v55 = vpop.permute.xlu0 %54
    %58 = vset.pattern.permute.xlu0 0
    %59 = vperm.xlu0 %58, %v40
    %v60 = vpop.permute.xlu0 %59
    %v62 = vlaneseq
    %v63 = vshrl.u32 %v62, 7
    %v64 = vsub.s32 0, %v63
    %v65 = vrot.slane %v41, %v64
    %v66 = vmul.f32 %v45, %v65
    %v67 = vmul.f32 %v50, %v65
    %v68 = vmul.f32 %v55, %v65
    %v69 = vmul.f32 %v60, %v65
    %70 = vset.pattern.permute.xlu0 1
    %71 = vperm.xlu0 %70, %v37
    %v72 = vpop.permute.xlu0 %71
    %74 = vset.pattern.permute.xlu0 1
    %75 = vperm.xlu0 %74, %v38
    %v76 = vpop.permute.xlu0 %75
    %78 = vset.pattern.permute.xlu0 1
    %79 = vperm.xlu0 %78, %v39
    %v80 = vpop.permute.xlu0 %79
    %82 = vset.pattern.permute.xlu0 1
    %83 = vperm.xlu0 %82, %v40
    %v84 = vpop.permute.xlu0 %83
    %v86 = vlaneseq
    %v87 = vshrl.u32 %v86, 7
    %v88 = vsub.s32 1, %v87
    %v89 = vrot.slane %v41, %v88
    %v90 = vmul.f32 %v72, %v89
    %v91 = vmul.f32 %v76, %v89
    %v92 = vmul.f32 %v80, %v89
    %v93 = vmul.f32 %v84, %v89
    %v94 = vadd.f32 %v66, %v90
    %v95 = vadd.f32 %v67, %v91
    %v96 = vadd.f32 %v68, %v92
    %v97 = vadd.f32 %v69, %v93
    %98 = vset.pattern.permute.xlu0 2
    %99 = vperm.xlu0 %98, %v37
    %v100 = vpop.permute.xlu0 %99
    %102 = vset.pattern.permute.xlu0 2
    %103 = vperm.xlu0 %102, %v38
    %v104 = vpop.permute.xlu0 %103
    %106 = vset.pattern.permute.xlu0 2
    %107 = vperm.xlu0 %106, %v39
    %v108 = vpop.permute.xlu0 %107
    %110 = vset.pattern.permute.xlu0 2
    %111 = vperm.xlu0 %110, %v40
    %v112 = vpop.permute.xlu0 %111
    %v114 = vlaneseq
    %v115 = vshrl.u32 %v114, 7
    %v116 = vsub.s32 2, %v115
    %v117 = vrot.slane %v41, %v116
    %v118 = vmul.f32 %v100, %v117
    %v119 = vmul.f32 %v104, %v117
    %v120 = vmul.f32 %v108, %v117
    %v121 = vmul.f32 %v112, %v117
    %v122 = vadd.f32 %v94, %v118
    %v123 = vadd.f32 %v95, %v119
    %v124 = vadd.f32 %v96, %v120
    %v125 = vadd.f32 %v97, %v121
    %p126 = scmp.eq.s32.totalorder 0, 0
    // Predicated region
    $region10: #{tpu_custom_call.1} parent=1 // pred_check
      %p127 = pneg %p126
    $region11: #{tpu_custom_call.1} parent=1 // pred_check_branch
      %129 = sbr.rel (%p127) target = $region13
    $region12: #{tpu_custom_call.1} parent=1 // pred_region
      %vm130 = vcmask 516096
      %131 = vst.msk [vmem:[#allocation2] sm:$0x1] %vm130, 0.0
      %132 = vst.msk [vmem:[#allocation4] sm:$0x1] %vm130, 0.0
    $region13: #{tpu_custom_call.1} parent=1 // pred_fallthru
      _
    %v133 = vld [vmem:[#allocation2] sm:$0x1]
    %vm134 = vcmask 261120
    %v136 = vsel %vm134, 1.0, 0
    %138 = vmatprep.subr.mxu0 0.0
    %139 = vmatpush1.msra.mxu0 %v122
    %140 = vmatprep.subr.mxu0 0.0
    %141 = vmatpush1.msra.mxu0 %v123
    %142 = vmatprep.subr.mxu0 0.0
    %143 = vmatpush1.msra.mxu0 %v124
    %144 = vmatprep.subr.mxu0 0.0
    %145 = vmatpush1.msra.mxu0 %v125
    %146 = vmatprep.subr.mxu0 0.0
    %147 = vmatpush1.msra.mxu0 0.0
    %148 = vmatprep.subr.mxu0 0.0
    %149 = vmatpush1.msra.mxu0 0.0
    %150 = vmatprep.subr.mxu0 0.0
    %151 = vmatpush1.msra.mxu0 0.0
    %152 = vmatprep.subr.mxu0 0.0
    %153 = vmatpush1.msra.mxu0 0.0
    %154 = vmatprep.subr.mxu0 0.0
    %155 = vmatpush1.msra.mxu0 0.0
    %156 = vmatprep.subr.mxu0 0.0
    %157 = vmatpush1.msra.mxu0 0.0
    %158 = vmatprep.subr.mxu0 0.0
    %159 = vmatpush1.msra.mxu0 0.0
    %160 = vmatprep.subr.mxu0 0.0
    %161 = vmatpush1.msra.mxu0 0.0
    %162 = vmatprep.subr.mxu0 0.0
    %163 = vmatpush1.msra.mxu0 0.0
    %164 = vmatprep.subr.mxu0 0.0
    %165 = vmatpush1.msra.mxu0 0.0
    %166 = vmatprep.subr.mxu0 0.0
    %167 = vmatpush1.msra.mxu0 0.0
    %168 = vmatprep.subr.mxu0 0.0
    %169 = vmatpush1.msra.mxu0 0.0
    %170 = vmatprep.subr.mxu0 0.0
    %171 = vmatpush1.msra.mxu0 0.0
    %172 = vmatprep.subr.mxu0 0.0
    %173 = vmatpush1.msra.mxu0 0.0
    %174 = vmatprep.subr.mxu0 0.0
    %175 = vmatpush1.msra.mxu0 0.0
    %176 = vmatprep.subr.mxu0 0.0
    %177 = vmatpush1.msra.mxu0 0.0
    %178 = vmatprep.subr.mxu0 0.0
    %179 = vmatpush1.msra.mxu0 0.0
    %180 = vmatprep.subr.mxu0 0.0
    %181 = vmatpush1.msra.mxu0 0.0
    %182 = vmatprep.subr.mxu0 0.0
    %183 = vmatpush1.msra.mxu0 0.0
    %184 = vmatprep.subr.mxu0 0.0
    %185 = vmatpush1.msra.mxu0 0.0
    %186 = vmatprep.subr.mxu0 0.0
    %187 = vmatpush1.msra.mxu0 0.0
    %188 = vmatprep.subr.mxu0 0.0
    %189 = vmatpush1.msra.mxu0 0.0
    %190 = vmatprep.subr.mxu0 0.0
    %191 = vmatpush1.msra.mxu0 0.0
    %192 = vmatprep.subr.mxu0 0.0
    %193 = vmatpush1.msra.mxu0 0.0
    %194 = vmatprep.subr.mxu0 0.0
    %195 = vmatpush1.msra.mxu0 0.0
    %196 = vmatprep.subr.mxu0 0.0
    %197 = vmatpush1.msra.mxu0 0.0
    %198 = vmatprep.subr.mxu0 0.0
    %199 = vmatpush1.msra.mxu0 0.0
    %200 = vmatprep.subr.mxu0 0.0
    %201 = vmatpush1.msra.mxu0 0.0
    %202 = vmatprep.mubr.f32.mxu0 0.0
    %203 = vmatmul.mubr.f32.gmra.mrb[0].mxu0 %v136
    %v204 = vpop.f32.mrb[0].mxu0
    %v205 = vadd.f32 0.0, %v204
    %v206 = vpop.f32.mrb[0].mxu0
    %207 = vdwg.mxu0
    %v208 = vadd.f32 %v133, %v205
    %vm209 = vcmask 516096
    %210 = vst.msk [vmem:[#allocation2] sm:$0x1] %vm209, %v208
    %v211 = vld [vmem:[#allocation4] sm:$0x1]
    %v212 = vmul.f32 %v122, %v122
    %v213 = vmul.f32 %v123, %v123
    %v214 = vmul.f32 %v124, %v124
    %v215 = vmul.f32 %v125, %v125
    %216 = vmatprep.subr.mxu0 0.0
    %217 = vmatpush1.msra.mxu0 %v212
    %218 = vmatprep.subr.mxu0 0.0
    %219 = vmatpush1.msra.mxu0 %v213
    %220 = vmatprep.subr.mxu0 0.0
    %221 = vmatpush1.msra.mxu0 %v214
    %222 = vmatprep.subr.mxu0 0.0
    %223 = vmatpush1.msra.mxu0 %v215
    %224 = vmatprep.subr.mxu0 0.0
    %225 = vmatpush1.msra.mxu0 0.0
    %226 = vmatprep.subr.mxu0 0.0
    %227 = vmatpush1.msra.mxu0 0.0
    %228 = vmatprep.subr.mxu0 0.0
    %229 = vmatpush1.msra.mxu0 0.0
    %230 = vmatprep.subr.mxu0 0.0
    %231 = vmatpush1.msra.mxu0 0.0
    %232 = vmatprep.subr.mxu0 0.0
    %233 = vmatpush1.msra.mxu0 0.0
    %234 = vmatprep.subr.mxu0 0.0
    %235 = vmatpush1.msra.mxu0 0.0
    %236 = vmatprep.subr.mxu0 0.0
    %237 = vmatpush1.msra.mxu0 0.0
    %238 = vmatprep.subr.mxu0 0.0
    %239 = vmatpush1.msra.mxu0 0.0
    %240 = vmatprep.subr.mxu0 0.0
    %241 = vmatpush1.msra.mxu0 0.0
    %242 = vmatprep.subr.mxu0 0.0
    %243 = vmatpush1.msra.mxu0 0.0
    %244 = vmatprep.subr.mxu0 0.0
    %245 = vmatpush1.msra.mxu0 0.0
    %246 = vmatprep.subr.mxu0 0.0
    %247 = vmatpush1.msra.mxu0 0.0
    %248 = vmatprep.subr.mxu0 0.0
    %249 = vmatpush1.msra.mxu0 0.0
    %250 = vmatprep.subr.mxu0 0.0
    %251 = vmatpush1.msra.mxu0 0.0
    %252 = vmatprep.subr.mxu0 0.0
    %253 = vmatpush1.msra.mxu0 0.0
    %254 = vmatprep.subr.mxu0 0.0
    %255 = vmatpush1.msra.mxu0 0.0
    %256 = vmatprep.subr.mxu0 0.0
    %257 = vmatpush1.msra.mxu0 0.0
    %258 = vmatprep.subr.mxu0 0.0
    %259 = vmatpush1.msra.mxu0 0.0
    %260 = vmatprep.subr.mxu0 0.0
    %261 = vmatpush1.msra.mxu0 0.0
    %262 = vmatprep.subr.mxu0 0.0
    %263 = vmatpush1.msra.mxu0 0.0
    %264 = vmatprep.subr.mxu0 0.0
    %265 = vmatpush1.msra.mxu0 0.0
    %266 = vmatprep.subr.mxu0 0.0
    %267 = vmatpush1.msra.mxu0 0.0
    %268 = vmatprep.subr.mxu0 0.0
    %269 = vmatpush1.msra.mxu0 0.0
    %270 = vmatprep.subr.mxu0 0.0
    %271 = vmatpush1.msra.mxu0 0.0
    %272 = vmatprep.subr.mxu0 0.0
    %273 = vmatpush1.msra.mxu0 0.0
    %274 = vmatprep.subr.mxu0 0.0
    %275 = vmatpush1.msra.mxu0 0.0
    %276 = vmatprep.subr.mxu0 0.0
    %277 = vmatpush1.msra.mxu0 0.0
    %278 = vmatprep.subr.mxu0 0.0
    %279 = vmatpush1.msra.mxu0 0.0
    %280 = vmatprep.mubr.f32.mxu0 0.0
    %281 = vmatmul.mubr.f32.gmra.mrb[0].mxu0 %v136
    %v282 = vpop.f32.mrb[0].mxu0
    %v283 = vadd.f32 0.0, %v282
    %v284 = vpop.f32.mrb[0].mxu0
    %285 = vdwg.mxu0
    %v286 = vadd.f32 %v211, %v283
    %287 = vst.msk [vmem:[#allocation4] sm:$0x1] %vm209, %v286
    // Predicated region
    $region14: #{tpu_custom_call.1} parent=1 // pred_check
      _
    $region15: #{tpu_custom_call.1} parent=1 // pred_check_branch
      %289 = sbr.rel (0) target = $region17
    $region16: #{tpu_custom_call.1} parent=1 // pred_region
      %s291 = ssub.s32 16, 16
      %292 = vsyncadd [#allocation3], %s291
      %s294 = sshll.u32 [#allocation2], 4
      %s295 = int_to_ptr.vmem [resolvable:$true] %s294
      %297 = dma.vmem_to_hbm [thread:$0]  %s295, 16, %s2, [#allocation3]
    $region17: #{tpu_custom_call.1} parent=1 // pred_fallthru
      _
    // Predicated region
    $region18: #{tpu_custom_call.1} parent=1 // pred_check
      _
    $region19: #{tpu_custom_call.1} parent=1 // pred_check_branch
      %299 = sbr.rel (0) target = $region21
    $region20: #{tpu_custom_call.1} parent=1 // pred_region
      %s301 = ssub.s32 16, 16
      %302 = vsyncadd [#allocation5], %s301
      %s304 = sshll.u32 [#allocation4], 4
      %s305 = int_to_ptr.vmem [resolvable:$true] %s304
      %307 = dma.vmem_to_hbm [thread:$0]  %s305, 16, %s3, [#allocation5]
    $region21: #{tpu_custom_call.1} parent=1 // pred_fallthru
      _
    // Predicated region
    $region22: #{tpu_custom_call.1} parent=1 // pred_check
      _
    $region23: #{tpu_custom_call.1} parent=1 // pred_check_branch
      %309 = sbr.rel (0) target = $region25
    $region24: #{tpu_custom_call.1} parent=1 // pred_region
      %310 = dma.done [#allocation3], 16
    $region25: #{tpu_custom_call.1} parent=1 // pred_fallthru
      _
    // Predicated region
    $region26: #{tpu_custom_call.1} parent=1 // pred_check
      _
    $region27: #{tpu_custom_call.1} parent=1 // pred_check_branch
      %312 = sbr.rel (0) target = $region29
    $region28: #{tpu_custom_call.1} parent=1 // pred_region
      %313 = dma.done [#allocation5], 16
    $region29: #{tpu_custom_call.1} parent=1 // pred_fallthru
      _
    %314 = vsyncpa [#allocation3], 1
    %315 = vsyncpa [#allocation5], 1

</llo_original>
